<compile_context>
chip_gen: v7x
topology: tpu7x:2x2x1
jax: 0.10.0
libtpu: 0.0.40
codegen_flags: <defaults>
</compile_context>

<pallas_src>
import functools

import jax
import jax.numpy as jnp
from jax import lax
from jax.experimental import pallas as pl
from jax.experimental.pallas import tpu as pltpu


# ----------------------------- Fused kernel ---------------------------------

def _attention_head_kernel(x_ref, wq_ref, wk_ref, wv_ref, wp_ref, bp_ref,
                           o_ref, *, scale):
    """One grid step = (batch b, head h): qkv-slice GEMMs + softmax + proj-accum."""
    h = pl.program_id(1)
    N, C = x_ref.shape[1], x_ref.shape[2]

    # First head: initialise the resident output block with the proj bias.
    @pl.when(h == 0)
    def _():
        o_ref[0] = jnp.broadcast_to(bp_ref[...], (N, C)).astype(o_ref.dtype)

    x = x_ref[0]                                   # (N, C) bf16 (cast in wrapper)

    # Per-head projections: contraction depth = C (MXU-friendly), weights are
    # stored (D, C) so the rhs is lane-dense; NT dot_general avoids any
    # in-kernel transpose or lane-unaligned slicing.
    nt = (((1,), (1,)), ((), ()))
    q = lax.dot_general(x, wq_ref[0], nt, preferred_element_type=jnp.float32)  # (N, D)
    k = lax.dot_general(x, wk_ref[0], nt, preferred_element_type=jnp.float32)  # (N, D)
    v = lax.dot_general(x, wv_ref[0], nt, preferred_element_type=jnp.float32)  # (N, D)

    q = q * scale                                  # cheap: (N, D) VPU mul

    # Scores: contract the D dims directly (q @ k^T), f32 accumulate.
    s = lax.dot_general(q.astype(jnp.bfloat16), k.astype(jnp.bfloat16), nt,
                        preferred_element_type=jnp.float32)        # (N, N)

    # Softmax in f32 (max-subtracted); denominator via EUP approx reciprocal.
    s = s - jnp.max(s, axis=-1, keepdims=True)
    p = jnp.exp(s)
    denom = jnp.sum(p, axis=-1, keepdims=True)
    p = p * pl.reciprocal(denom, approx=True)
    # attn_drop ratio = 0.0 -> identity

    o_h = jnp.dot(p.astype(jnp.bfloat16), v.astype(jnp.bfloat16),
                  preferred_element_type=jnp.float32)              # (N, D)

    # Output projection folded into the head loop: accumulate this head's
    # contribution (o_h @ W_proj[h*D:(h+1)*D, :]) into the lane-dense (N, C)
    # output block.  proj_drop ratio = 0.0 -> identity.
    o_ref[0] += jnp.dot(o_h.astype(jnp.bfloat16), wp_ref[0],
                        preferred_element_type=jnp.float32)


# ------------------------------ Wrapper --------------------------------------

def attention_forward(x, params, num_heads):
    """Equivalent of Attention.forward (attn/proj dropout ratios = 0.0)."""
    B, N, C = x.shape
    H = num_heads
    D = C // H
    scale = D ** (-0.5)

    # One-time, head-major weight reorganisation + bf16 cast for the MXU.
    # Column h*D + d of each (q|k|v) block of w_qkv belongs to head h.
    w_qkv = params["w_qkv"]                                    # (C, 3C)

    def head_major(w):                                         # (C, C) -> (H, D, C)
        return jnp.transpose(w.reshape(C, H, D), (1, 2, 0))

    wq = head_major(w_qkv[:, 0 * C:1 * C]).astype(jnp.bfloat16)   # (H, D, C)
    wk = head_major(w_qkv[:, 1 * C:2 * C]).astype(jnp.bfloat16)   # (H, D, C)
    wv = head_major(w_qkv[:, 2 * C:3 * C]).astype(jnp.bfloat16)   # (H, D, C)
    wp = params["w_proj"].reshape(H, D, C).astype(jnp.bfloat16)   # (H, D, C)
    bp = params["b_proj"].reshape(1, C).astype(jnp.float32)       # (1, C)
    x_bf = x.astype(jnp.bfloat16)                                 # halve x DMA

    kernel = functools.partial(_attention_head_kernel, scale=scale)

    # Rough per-step VMEM need -> explicit scoped limit (matters on v5e).
    vmem_need = int(
        2 * N * C * 2            # x double buffer (bf16)
        + 2 * N * C * 4          # output double buffer (f32)
        + 2 * 4 * D * C * 2      # per-head wq/wk/wv/wproj double buffers (bf16)
        + 2 * C * 4              # bias
        + N * N * 4              # score matrix (f32)
        + 4 * N * D * 4          # q / k / v / o_h intermediates (f32)
    )
    vmem_limit = min(max(2 * vmem_need, 32 * 1024 * 1024), 64 * 1024 * 1024)

    cost = pl.CostEstimate(
        flops=int(2 * B * N * C * 3 * C      # qkv projection
                  + 4 * B * N * N * C        # scores + attn @ v
                  + 2 * B * N * C * C),      # output projection
        transcendentals=int(B * H * N * N),  # exp in softmax
        bytes_accessed=int(B * N * C * 2     # x (bf16)
                           + 4 * C * C * 2   # qkv + proj weights (bf16)
                           + C * 4           # bias
                           + B * N * C * 4), # output (f32)
    )

    return pl.pallas_call(
        kernel,
        out_shape=jax.ShapeDtypeStruct((B, N, C), jnp.float32),
        grid_spec=pltpu.PrefetchScalarGridSpec(
            num_scalar_prefetch=0,
            grid=(B, H),
            in_specs=[
                # x: resident across the head axis (same block index -> no re-DMA).
                pl.BlockSpec((1, N, C), lambda b, h: (b, 0, 0)),
                # Per-head weight slices delivered via BlockSpec (DMA-level
                # head addressing, no in-kernel slicing).
                pl.BlockSpec((1, D, C), lambda b, h: (h, 0, 0)),   # wq
                pl.BlockSpec((1, D, C), lambda b, h: (h, 0, 0)),   # wk
                pl.BlockSpec((1, D, C), lambda b, h: (h, 0, 0)),   # wv
                pl.BlockSpec((1, D, C), lambda b, h: (h, 0, 0)),   # w_proj rows
                pl.BlockSpec((1, C), lambda b, h: (0, 0)),         # b_proj
            ],
            # Output block is constant across h -> resident accumulator.
            out_specs=pl.BlockSpec((1, N, C), lambda b, h: (b, 0, 0)),
        ),
        compiler_params=pltpu.CompilerParams(
            dimension_semantics=("parallel", "arbitrary"),
            vmem_limit_bytes=vmem_limit),
        cost_estimate=cost,
    )(x_bf, wq, wk, wv, wp, bp)


# ------------------------------ Reference -------------------------------------

def attention_reference(x, params, num_heads):
    B, N, C = x.shape
    H = num_heads
    D = C // H
    scale = D ** (-0.5)
    qkv = (x.reshape(B * N, C) @ params["w_qkv"]).reshape(B, N, 3, H, D)
    qkv = qkv.transpose(2, 0, 3, 1, 4)
    q, k, v = qkv[0], qkv[1], qkv[2]
    attn = jnp.einsum("bhnd,bhmd->bhnm", q, k) * scale
    attn = jax.nn.softmax(attn, axis=-1)
    o = jnp.einsum("bhnm,bhmd->bhnd", attn, v)
    o = o.transpose(0, 2, 1, 3).reshape(B * N, C)
    y = o @ params["w_proj"] + params["b_proj"]
    return y.reshape(B, N, C)


# -------------------------------- Main ----------------------------------------

if __name__ == "__main__":
    B, N, C, H = 2, 8, 32, 8   # dim=32, num_heads=8 -> head_dim=4

    key = jax.random.PRNGKey(0)
    kx, kq, kp, kb = jax.random.split(key, 4)
    x = jax.random.normal(kx, (B, N, C), dtype=jnp.float32)
    params = {
        "w_qkv": jax.random.normal(kq, (C, 3 * C), dtype=jnp.float32) * 0.05,
        "w_proj": jax.random.normal(kp, (C, C), dtype=jnp.float32) * 0.05,
        "b_proj": jax.random.normal(kb, (C,), dtype=jnp.float32) * 0.05,
    }

    out = jax.block_until_ready(attention_forward(x, params, num_heads=H))
    ref = attention_reference(x, params, num_heads=H)

    assert out.shape == (B, N, C)
    # bf16 MXU inputs + approx reciprocal -> looser tolerance vs f32 reference.
    assert jnp.allclose(out, ref, atol=1e-2, rtol=1e-2), \
        float(jnp.max(jnp.abs(out - ref)))

    print("KERNEL_OK")
</pallas_src>

<mosaic_0001>
module attributes {stable_mosaic.version = 11 : i64} {
  func.func @_attention_head_kernel(%arg0: i32, %arg1: i32, %arg2: memref<1x8x32xbf16, #tpu.memory_space<vmem>>, %arg3: memref<1x4x32xbf16, #tpu.memory_space<vmem>>, %arg4: memref<1x4x32xbf16, #tpu.memory_space<vmem>>, %arg5: memref<1x4x32xbf16, #tpu.memory_space<vmem>>, %arg6: memref<1x4x32xbf16, #tpu.memory_space<vmem>>, %arg7: memref<1x32xf32, #tpu.memory_space<vmem>>, %arg8: memref<1x8x32xf32, #tpu.memory_space<vmem>>) attributes {dimension_semantics = [#tpu.dimension_semantics<parallel>, #tpu.dimension_semantics<arbitrary>], iteration_bounds = array<i64: 2, 8>, scalar_prefetch = 0 : i64, scratch_operands = 0 : i64, tpu.core_type = #tpu.core_type<tc>, window_params = [{transform_indices = @transform_0, window_bounds = array<i64: 1, 8, 32>}, {transform_indices = @transform_1, window_bounds = array<i64: 1, 4, 32>}, {transform_indices = @transform_2, window_bounds = array<i64: 1, 4, 32>}, {transform_indices = @transform_3, window_bounds = array<i64: 1, 4, 32>}, {transform_indices = @transform_4, window_bounds = array<i64: 1, 4, 32>}, {pipeline_mode = #tpu.pipeline_mode<synchronous>, transform_indices = @transform_5, window_bounds = array<i64: 1, 32>}, {transform_indices = @transform_6, window_bounds = array<i64: 1, 8, 32>}]} {
    %c0_i32 = arith.constant 0 : i32
    %0 = arith.cmpi eq, %arg1, %c0_i32 : i32
    %1 = arith.extui %0 : i1 to i32
    %c0_i32_0 = arith.constant 0 : i32
    %2 = arith.cmpi ne, %1, %c0_i32_0 : i32
    scf.if %2 {
      %c0_29 = arith.constant 0 : index
      %c0_30 = arith.constant 0 : index
      %42 = vector.load %arg7[%c0_29, %c0_30] : memref<1x32xf32, #tpu.memory_space<vmem>>, vector<1x32xf32>
      %43 = vector.shape_cast %42 : vector<1x32xf32> to vector<1x32xf32>
      %44 = vector.broadcast %43 : vector<1x32xf32> to vector<8x32xf32>
      %c0_31 = arith.constant 0 : index
      %c0_32 = arith.constant 0 : index
      %c0_33 = arith.constant 0 : index
      %45 = vector.load %arg8[%c0_31, %c0_32, %c0_33] : memref<1x8x32xf32, #tpu.memory_space<vmem>>, vector<1x8x32xf32>
      %46 = vector.shape_cast %45 : vector<1x8x32xf32> to vector<8x32xf32>
      %47 = vector.shape_cast %44 : vector<8x32xf32> to vector<1x8x32xf32>
      tpu.vector_store %arg8[%c0_31, %c0_32, %c0_33], %47 {strides = array<i32>} : memref<1x8x32xf32, #tpu.memory_space<vmem>>, vector<1x8x32xf32>,
    } else {
    }
    %c0 = arith.constant 0 : index
    %c0_1 = arith.constant 0 : index
    %c0_2 = arith.constant 0 : index
    %3 = vector.load %arg2[%c0, %c0_1, %c0_2] : memref<1x8x32xbf16, #tpu.memory_space<vmem>>, vector<1x8x32xbf16>
    %4 = vector.shape_cast %3 : vector<1x8x32xbf16> to vector<8x32xbf16>
    %c0_3 = arith.constant 0 : index
    %c0_4 = arith.constant 0 : index
    %c0_5 = arith.constant 0 : index
    %5 = vector.load %arg3[%c0_3, %c0_4, %c0_5] : memref<1x4x32xbf16, #tpu.memory_space<vmem>>, vector<1x4x32xbf16>
    %6 = vector.shape_cast %5 : vector<1x4x32xbf16> to vector<4x32xbf16>
    %cst = arith.constant dense<0.000000e+00> : vector<8x4xf32>
    %7 = tpu.matmul %4, %6, %cst {dimension_numbers = #tpu.dot_dimension_numbers<[1], [1], [0], [0], [0, 0, 1, 0], [], []>} : vector<8x32xbf16>, vector<4x32xbf16>, vector<8x4xf32> -> vector<8x4xf32>
    %c0_6 = arith.constant 0 : index
    %c0_7 = arith.constant 0 : index
    %c0_8 = arith.constant 0 : index
    %8 = vector.load %arg4[%c0_6, %c0_7, %c0_8] : memref<1x4x32xbf16, #tpu.memory_space<vmem>>, vector<1x4x32xbf16>
    %9 = vector.shape_cast %8 : vector<1x4x32xbf16> to vector<4x32xbf16>
    %cst_9 = arith.constant dense<0.000000e+00> : vector<8x4xf32>
    %10 = tpu.matmul %4, %9, %cst_9 {dimension_numbers = #tpu.dot_dimension_numbers<[1], [1], [0], [0], [0, 0, 1, 0], [], []>} : vector<8x32xbf16>, vector<4x32xbf16>, vector<8x4xf32> -> vector<8x4xf32>
    %c0_10 = arith.constant 0 : index
    %c0_11 = arith.constant 0 : index
    %c0_12 = arith.constant 0 : index
    %11 = vector.load %arg5[%c0_10, %c0_11, %c0_12] : memref<1x4x32xbf16, #tpu.memory_space<vmem>>, vector<1x4x32xbf16>
    %12 = vector.shape_cast %11 : vector<1x4x32xbf16> to vector<4x32xbf16>
    %cst_13 = arith.constant dense<0.000000e+00> : vector<8x4xf32>
    %13 = tpu.matmul %4, %12, %cst_13 {dimension_numbers = #tpu.dot_dimension_numbers<[1], [1], [0], [0], [0, 0, 1, 0], [], []>} : vector<8x32xbf16>, vector<4x32xbf16>, vector<8x4xf32> -> vector<8x4xf32>
    %cst_14 = arith.constant 5.000000e-01 : f32
    %14 = vector.broadcast %cst_14 : f32 to vector<8x4xf32>
    %15 = arith.mulf %7, %14 : vector<8x4xf32>
    %16 = arith.truncf %15 : vector<8x4xf32> to vector<8x4xbf16>
    %17 = arith.truncf %10 : vector<8x4xf32> to vector<8x4xbf16>
    %cst_15 = arith.constant dense<0.000000e+00> : vector<8x8xf32>
    %18 = tpu.matmul %16, %17, %cst_15 {dimension_numbers = #tpu.dot_dimension_numbers<[1], [1], [0], [0], [0, 0, 1, 0], [], []>} : vector<8x4xbf16>, vector<8x4xbf16>, vector<8x8xf32> -> vector<8x8xf32>
    %cst_16 = arith.constant dense<0xFF800000> : vector<8xf32>
    %19 = vector.multi_reduction <maximumf>, %18, %cst_16 [1] : vector<8x8xf32> to vector<8xf32>
    %20 = vector.shape_cast %19 : vector<8xf32> to vector<8x1xf32>
    %21 = vector.broadcast %20 : vector<8x1xf32> to vector<8x8xf32>
    %22 = arith.subf %18, %21 : vector<8x8xf32>
    %23 = math.exp %22 : vector<8x8xf32>
    %cst_17 = arith.constant dense<0.000000e+00> : vector<8xf32>
    %24 = vector.multi_reduction <add>, %23, %cst_17 [1] : vector<8x8xf32> to vector<8xf32>
    %25 = vector.shape_cast %24 : vector<8xf32> to vector<8x1xf32>
    %26 = tpu.reciprocal %25 {approx = true} : vector<8x1xf32> -> vector<8x1xf32>
    %27 = vector.broadcast %26 : vector<8x1xf32> to vector<8x8xf32>
    %28 = arith.mulf %23, %27 : vector<8x8xf32>
    %29 = arith.truncf %28 : vector<8x8xf32> to vector<8x8xbf16>
    %30 = arith.truncf %13 : vector<8x4xf32> to vector<8x4xbf16>
    %cst_18 = arith.constant dense<0.000000e+00> : vector<8x4xf32>
    %31 = tpu.matmul %29, %30, %cst_18 {dimension_numbers = #tpu.dot_dimension_numbers<[1], [0], [0], [1], [0, 0, 1, 1], [], []>} : vector<8x8xbf16>, vector<8x4xbf16>, vector<8x4xf32> -> vector<8x4xf32>
    %c0_19 = arith.constant 0 : index
    %c0_20 = arith.constant 0 : index
    %c0_21 = arith.constant 0 : index
    %32 = vector.load %arg8[%c0_19, %c0_20, %c0_21] : memref<1x8x32xf32, #tpu.memory_space<vmem>>, vector<1x8x32xf32>
    %33 = vector.shape_cast %32 : vector<1x8x32xf32> to vector<8x32xf32>
    %34 = arith.truncf %31 : vector<8x4xf32> to vector<8x4xbf16>
    %c0_22 = arith.constant 0 : index
    %c0_23 = arith.constant 0 : index
    %c0_24 = arith.constant 0 : index
    %35 = vector.load %arg6[%c0_22, %c0_23, %c0_24] : memref<1x4x32xbf16, #tpu.memory_space<vmem>>, vector<1x4x32xbf16>
    %36 = vector.shape_cast %35 : vector<1x4x32xbf16> to vector<4x32xbf16>
    %cst_25 = arith.constant dense<0.000000e+00> : vector<8x32xf32>
    %37 = tpu.matmul %34, %36, %cst_25 {dimension_numbers = #tpu.dot_dimension_numbers<[1], [0], [0], [1], [0, 0, 1, 1], [], []>} : vector<8x4xbf16>, vector<4x32xbf16>, vector<8x32xf32> -> vector<8x32xf32>
    %38 = arith.addf %33, %37 : vector<8x32xf32>
    %c0_26 = arith.constant 0 : index
    %c0_27 = arith.constant 0 : index
    %c0_28 = arith.constant 0 : index
    %39 = vector.load %arg8[%c0_26, %c0_27, %c0_28] : memref<1x8x32xf32, #tpu.memory_space<vmem>>, vector<1x8x32xf32>
    %40 = vector.shape_cast %39 : vector<1x8x32xf32> to vector<8x32xf32>
    %41 = vector.shape_cast %38 : vector<8x32xf32> to vector<1x8x32xf32>
    tpu.vector_store %arg8[%c0_26, %c0_27, %c0_28], %41 {strides = array<i32>} : memref<1x8x32xf32, #tpu.memory_space<vmem>>, vector<1x8x32xf32>,
    return
  }
  func.func @transform_0(%arg0: i32, %arg1: i32) -> (i32, i32, i32) {
    %c0_i32 = arith.constant 0 : i32
    %c0_i32_0 = arith.constant 0 : i32
    %c0_i32_1 = arith.constant 0 : i32
    return %arg0, %c0_i32, %c0_i32_0 : i32, i32, i32
  }
  func.func @transform_1(%arg0: i32, %arg1: i32) -> (i32, i32, i32) {
    %c0_i32 = arith.constant 0 : i32
    %c0_i32_0 = arith.constant 0 : i32
    %c0_i32_1 = arith.constant 0 : i32
    return %arg1, %c0_i32, %c0_i32_0 : i32, i32, i32
  }
  func.func @transform_2(%arg0: i32, %arg1: i32) -> (i32, i32, i32) {
    %c0_i32 = arith.constant 0 : i32
    %c0_i32_0 = arith.constant 0 : i32
    %c0_i32_1 = arith.constant 0 : i32
    return %arg1, %c0_i32, %c0_i32_0 : i32, i32, i32
  }
  func.func @transform_3(%arg0: i32, %arg1: i32) -> (i32, i32, i32) {
    %c0_i32 = arith.constant 0 : i32
    %c0_i32_0 = arith.constant 0 : i32
    %c0_i32_1 = arith.constant 0 : i32
    return %arg1, %c0_i32, %c0_i32_0 : i32, i32, i32
  }
  func.func @transform_4(%arg0: i32, %arg1: i32) -> (i32, i32, i32) {
    %c0_i32 = arith.constant 0 : i32
    %c0_i32_0 = arith.constant 0 : i32
    %c0_i32_1 = arith.constant 0 : i32
    return %arg1, %c0_i32, %c0_i32_0 : i32, i32, i32
  }
  func.func @transform_5(%arg0: i32, %arg1: i32) -> (i32, i32) {
    %c0_i32 = arith.constant 0 : i32
    %c0_i32_0 = arith.constant 0 : i32
    %c0_i32_1 = arith.constant 0 : i32
    return %c0_i32, %c0_i32_0 : i32, i32
  }
  func.func @transform_6(%arg0: i32, %arg1: i32) -> (i32, i32, i32) {
    %c0_i32 = arith.constant 0 : i32
    %c0_i32_0 = arith.constant 0 : i32
    %c0_i32_1 = arith.constant 0 : i32
    return %arg0, %c0_i32, %c0_i32_0 : i32, i32, i32
  }
}

</mosaic_0001>

<llo_original>
// kernel: tpu_custom_call.1
$region0: #{tpu_custom_call.1}
  #allocation0 [shape = 'u32[]', space=smem, size = 0x4, offset = 0x4, fixed_abs, tag = 'smem constant byte address 0x4 - core index']
  #allocation1 [shape = 'u32[144,128]{1,0:T(1,128)}', space=vmem, size = 0x12000, scoped, tag = 'internal scratch']
  %s0 = inlined_call_operand.hbm [shape: bf16[2,8,32], index: 0, kind: input, shape index: {}]
  %s1 = inlined_call_operand.hbm [shape: bf16[8,4,32], index: 1, kind: input, shape index: {}]
  %s2 = inlined_call_operand.hbm [shape: bf16[8,4,32], index: 2, kind: input, shape index: {}]
  %s3 = inlined_call_operand.hbm [shape: bf16[8,4,32], index: 3, kind: input, shape index: {}]
  %s4 = inlined_call_operand.hbm [shape: bf16[8,4,32], index: 4, kind: input, shape index: {}]
  %s5 = inlined_call_operand.vmem [shape: f32[1,32], index: 5, kind: input, shape index: {}]
  %s6 = inlined_call_operand.hbm [shape: f32[2,8,32], index: 6, kind: output, shape index: {}]
  %s7 = sld [smem:[#allocation0]]
  $region81: #{tpu_custom_call.1} parent=0
    _
  %s9 = ssub.s32 1, %s7
  %s10 = scalar_select 0, %s9, %s7
  $region1: #{tpu_custom_call.1} parent=0
    #allocation2 [shape = 'u8[4096]{0}', space=vmem, size = 0x1000, scoped, tag = 'input window, operand 0']
    #allocation3 [shape = 's32[2]{0}', space=sflag, size = 0x8, scoped, tag = 'scoped memory for tpu_custom_call.1']
    #allocation4 [shape = 's32[2]{0}', space=sflag, size = 0x8, scoped, tag = 'scoped memory for tpu_custom_call.1']
    #allocation5 [shape = 'u8[2048]{0}', space=vmem, size = 0x800, scoped, tag = 'input window, operand 1']
    #allocation6 [shape = 's32[2]{0}', space=sflag, size = 0x8, scoped, tag = 'scoped memory for tpu_custom_call.1']
    #allocation7 [shape = 'u8[2048]{0}', space=vmem, size = 0x800, scoped, tag = 'input window, operand 2']
    #allocation8 [shape = 'u8[2048]{0}', space=vmem, size = 0x800, scoped, tag = 'input window, operand 3']
    #allocation9 [shape = 's32[2]{0}', space=sflag, size = 0x8, scoped, tag = 'scoped memory for tpu_custom_call.1']
    #allocation10 [shape = 'u8[2048]{0}', space=vmem, size = 0x800, scoped, tag = 'input window, operand 4']
    #allocation11 [shape = 'u8[8192]{0}', space=vmem, size = 0x2000, scoped, tag = 'output window, operand 0']
    %11 = vsyncpa [#allocation3], 0
    %s12 = scalar_lea.sflag [#allocation3], 1
    %13 = vsyncpa %s12, 0
    %14 = vsyncpa [#allocation6], 0
    %s15 = scalar_lea.sflag [#allocation6], 1
    %16 = vsyncpa %s15, 0
    %17 = vsyncpa [#allocation9], 0
    %s18 = scalar_lea.sflag [#allocation9], 1
    %19 = vsyncpa %s18, 0
    %20 = vsyncpa [#allocation4], 0
    %s21 = scalar_lea.sflag [#allocation4], 1
    %22 = vsyncpa %s21, 0
    loop: start=0, step=1, limit=18
    $region2: #{tpu_custom_call.1} parent=1 // loop_pre_header
      _
    $region3: #{tpu_custom_call.1} parent=1 // loop_header
      %s24 = sphi 0, %s28
      %p25 = scmp.ge.s32.totalorder %s24, 18
      %s31 = sphi 0, %s43
      %s32 = sphi 0, %s39
      %s33 = sphi 0, %s31
      %s34 = sphi 0, %s32
      %s35 = sphi 0, %s33
      %s36 = sphi 0, %s34
      %s46 = sphi 0, %s48
      %s49 = sphi 0, %s46
      %s50 = sphi 0, %s49
      %s66 = sphi 0, %s50
      %s72 = sphi 0, %s74
      %s75 = sphi 0, %s72
      %s76 = sphi 0, %s75
      %s92 = sphi 0, %s76
      %s98 = sphi 0, %s100
      %s101 = sphi 0, %s98
      %s102 = sphi 0, %s101
      %s118 = sphi 0, %s102
      %s124 = sphi 0, %s126
      %s127 = sphi 0, %s124
      %s128 = sphi 0, %s127
      %s144 = sphi 0, %s128
      %s150 = sphi 0, %s152
      %s153 = sphi 0, %s150
      %s154 = sphi 0, %s153
      %s170 = sphi 0, %s154
      %s174 = sphi 0, %s174
      %s176 = sphi 0, %s174
      %s177 = sphi 0, %s176
      %s191 = sphi 0, %s177
      %s197 = sphi 0, %s199
      %s200 = sphi 0, %s197
      %s201 = sphi 0, %s200
      %s217 = sphi 0, %s201
    $region4: #{tpu_custom_call.1} parent=1 // loop_header_branch
      %27 = sbr.rel (%p25) target = $region8
    $region5: #{tpu_custom_call.1} parent=1 // loop_body
      %s29 = ssub.s32 %s24, 1
      %s30 = ssub.s32 %s24, 2
      %s37 = sadd.s32 1, %s32
      %p38 = scmp.ge.s32.totalorder %s37, 8
      %s39 = scalar_select %p38, 0, %s37
      %s40 = sadd.s32 1, %s31
      %s41 = scalar_select %p38, %s40, %s31
      %p42 = scmp.ge.s32.totalorder %s41, 2
      %s43 = scalar_select %p42, 0, %s41
      %s44 = ssub.s32 %s31, %s43
      %p45 = scmp.eq.s32.totalorder %s44, 0
      %s47 = sadd.s32 %s46, 1
      %s48 = scalar_select %p45, %s46, %s47
      %p51 = pneg %p45
      %p52 = scmp.eq.s32.totalorder %s24, 15
      %p53 = por %p51, %p52
      %p54 = scmp.ne.s32.totalorder %s46, %s49
      %p55 = scmp.eq.s32.totalorder %s24, 0
      %p56 = por %p54, %p55
      %p57 = scmp.ne.s32.totalorder %s46, %s49
      %p58 = scmp.eq.s32.totalorder %s29, 15
      %p59 = por %p57, %p58
      %p60 = scmp.ne.s32.totalorder %s49, %s50
      %p61 = scmp.eq.s32.totalorder %s29, 0
      %p62 = por %p60, %p61
      %p63 = scmp.ne.s32.totalorder %s49, %s50
      %p64 = scmp.eq.s32.totalorder %s30, 15
      %p65 = por %p63, %p64
      %p67 = scmp.ne.s32.totalorder %s50, %s66
      %p68 = scmp.eq.s32.totalorder %s30, 0
      %p69 = por %p67, %p68
      %s70 = ssub.s32 %s32, %s39
      %p71 = scmp.eq.s32.totalorder %s70, 0
      %s73 = sadd.s32 %s72, 1
      %s74 = scalar_select %p71, %s72, %s73
      %p77 = pneg %p71
      %p78 = scmp.eq.s32.totalorder %s24, 15
      %p79 = por %p77, %p78
      %p80 = scmp.ne.s32.totalorder %s72, %s75
      %p81 = scmp.eq.s32.totalorder %s24, 0
      %p82 = por %p80, %p81
      %p83 = scmp.ne.s32.totalorder %s72, %s75
      %p84 = scmp.eq.s32.totalorder %s29, 15
      %p85 = por %p83, %p84
      %p86 = scmp.ne.s32.totalorder %s75, %s76
      %p87 = scmp.eq.s32.totalorder %s29, 0
      %p88 = por %p86, %p87
      %p89 = scmp.ne.s32.totalorder %s75, %s76
      %p90 = scmp.eq.s32.totalorder %s30, 15
      %p91 = por %p89, %p90
      %p93 = scmp.ne.s32.totalorder %s76, %s92
      %p94 = scmp.eq.s32.totalorder %s30, 0
      %p95 = por %p93, %p94
      %s96 = ssub.s32 %s32, %s39
      %p97 = scmp.eq.s32.totalorder %s96, 0
      %s99 = sadd.s32 %s98, 1
      %s100 = scalar_select %p97, %s98, %s99
      %p103 = pneg %p97
      %p104 = scmp.eq.s32.totalorder %s24, 15
      %p105 = por %p103, %p104
      %p106 = scmp.ne.s32.totalorder %s98, %s101
      %p107 = scmp.eq.s32.totalorder %s24, 0
      %p108 = por %p106, %p107
      %p109 = scmp.ne.s32.totalorder %s98, %s101
      %p110 = scmp.eq.s32.totalorder %s29, 15
      %p111 = por %p109, %p110
      %p112 = scmp.ne.s32.totalorder %s101, %s102
      %p113 = scmp.eq.s32.totalorder %s29, 0
      %p114 = por %p112, %p113
      %p115 = scmp.ne.s32.totalorder %s101, %s102
      %p116 = scmp.eq.s32.totalorder %s30, 15
      %p117 = por %p115, %p116
      %p119 = scmp.ne.s32.totalorder %s102, %s118
      %p120 = scmp.eq.s32.totalorder %s30, 0
      %p121 = por %p119, %p120
      %s122 = ssub.s32 %s32, %s39
      %p123 = scmp.eq.s32.totalorder %s122, 0
      %s125 = sadd.s32 %s124, 1
      %s126 = scalar_select %p123, %s124, %s125
      %p129 = pneg %p123
      %p130 = scmp.eq.s32.totalorder %s24, 15
      %p131 = por %p129, %p130
      %p132 = scmp.ne.s32.totalorder %s124, %s127
      %p133 = scmp.eq.s32.totalorder %s24, 0
      %p134 = por %p132, %p133
      %p135 = scmp.ne.s32.totalorder %s124, %s127
      %p136 = scmp.eq.s32.totalorder %s29, 15
      %p137 = por %p135, %p136
      %p138 = scmp.ne.s32.totalorder %s127, %s128
      %p139 = scmp.eq.s32.totalorder %s29, 0
      %p140 = por %p138, %p139
      %p141 = scmp.ne.s32.totalorder %s127, %s128
      %p142 = scmp.eq.s32.totalorder %s30, 15
      %p143 = por %p141, %p142
      %p145 = scmp.ne.s32.totalorder %s128, %s144
      %p146 = scmp.eq.s32.totalorder %s30, 0
      %p147 = por %p145, %p146
      %s148 = ssub.s32 %s32, %s39
      %p149 = scmp.eq.s32.totalorder %s148, 0
      %s151 = sadd.s32 %s150, 1
      %s152 = scalar_select %p149, %s150, %s151
      %p155 = pneg %p149
      %p156 = scmp.eq.s32.totalorder %s24, 15
      %p157 = por %p155, %p156
      %p158 = scmp.ne.s32.totalorder %s150, %s153
      %p159 = scmp.eq.s32.totalorder %s24, 0
      %p160 = por %p158, %p159
      %p161 = scmp.ne.s32.totalorder %s150, %s153
      %p162 = scmp.eq.s32.totalorder %s29, 15
      %p163 = por %p161, %p162
      %p164 = scmp.ne.s32.totalorder %s153, %s154
      %p165 = scmp.eq.s32.totalorder %s29, 0
      %p166 = por %p164, %p165
      %p167 = scmp.ne.s32.totalorder %s153, %s154
      %p168 = scmp.eq.s32.totalorder %s30, 15
      %p169 = por %p167, %p168
      %p171 = scmp.ne.s32.totalorder %s154, %s170
      %p172 = scmp.eq.s32.totalorder %s30, 0
      %p173 = por %p171, %p172
      %s175 = sadd.s32 %s174, 1
      %p178 = scmp.eq.s32.totalorder %s24, 15
      %p179 = scmp.ne.s32.totalorder %s174, %s176
      %p180 = scmp.eq.s32.totalorder %s24, 0
      %p181 = por %p179, %p180
      %p182 = scmp.ne.s32.totalorder %s174, %s176
      %p183 = scmp.eq.s32.totalorder %s29, 15
      %p184 = por %p182, %p183
      %p185 = scmp.ne.s32.totalorder %s176, %s177
      %p186 = scmp.eq.s32.totalorder %s29, 0
      %p187 = por %p185, %p186
      %p188 = scmp.ne.s32.totalorder %s176, %s177
      %p189 = scmp.eq.s32.totalorder %s30, 15
      %p190 = por %p188, %p189
      %p192 = scmp.ne.s32.totalorder %s177, %s191
      %p193 = scmp.eq.s32.totalorder %s30, 0
      %p194 = por %p192, %p193
      %s195 = ssub.s32 %s31, %s43
      %p196 = scmp.eq.s32.totalorder %s195, 0
      %s198 = sadd.s32 %s197, 1
      %s199 = scalar_select %p196, %s197, %s198
      %p202 = pneg %p196
      %p203 = scmp.eq.s32.totalorder %s24, 15
      %p204 = por %p202, %p203
      %p205 = scmp.ne.s32.totalorder %s197, %s200
      %p206 = scmp.eq.s32.totalorder %s24, 0
      %p207 = por %p205, %p206
      %p208 = scmp.ne.s32.totalorder %s197, %s200
      %p209 = scmp.eq.s32.totalorder %s29, 15
      %p210 = por %p208, %p209
      %p211 = scmp.ne.s32.totalorder %s200, %s201
      %p212 = scmp.eq.s32.totalorder %s29, 0
      %p213 = por %p211, %p212
      %p214 = scmp.ne.s32.totalorder %s200, %s201
      %p215 = scmp.eq.s32.totalorder %s30, 15
      %p216 = por %p214, %p215
      %p218 = scmp.ne.s32.totalorder %s201, %s217
      %p219 = scmp.eq.s32.totalorder %s30, 0
      %p220 = por %p218, %p219
      %p221 = scmp.le.s32.totalorder 1, %s24
      %p222 = scmp.lt.s32.totalorder %s24, 17
      %p223 = pnand %p221, %p222
      %p224 = pneg %p223
      // Predicated region
      $region9: #{tpu_custom_call.1} parent=5 // pred_check
        _
      $region10: #{tpu_custom_call.1} parent=5 // pred_check_branch
        %226 = sbr.rel (%p223) target = $region12
      $region11: #{tpu_custom_call.1} parent=5 // pred_region
        %s227 = ssub.s32 %s24, 1
        // Predicated region
        $region13: #{tpu_custom_call.1} parent=11 // pred_check
          %p228 = pneg %p187
        $region14: #{tpu_custom_call.1} parent=11 // pred_check_branch
          %230 = sbr.rel (%p228) target = $region16
        $region15: #{tpu_custom_call.1} parent=11 // pred_region
          _
        $region16: #{tpu_custom_call.1} parent=11 // pred_fallthru
          _
      $region12: #{tpu_custom_call.1} parent=5 // pred_fallthru
        _
      %p231 = scmp.lt.s32.totalorder %s24, 16
      // Predicated region
      $region17: #{tpu_custom_call.1} parent=5 // pred_check
        %p232 = pneg %p231
      $region18: #{tpu_custom_call.1} parent=5 // pred_check_branch
        %234 = sbr.rel (%p232) target = $region20
      $region19: #{tpu_custom_call.1} parent=5 // pred_region
        // Predicated region
        $region21: #{tpu_custom_call.1} parent=19 // pred_check
          %p235 = pneg %p56
        $region22: #{tpu_custom_call.1} parent=19 // pred_check_branch
          %237 = sbr.rel (%p235) target = $region24
        $region23: #{tpu_custom_call.1} parent=19 // pred_region
          %s238 = sand.u32 %s46, 1
          %s239 = scalar_lea.sflag [#allocation3], %s238
          %s240 = sand.u32 %s46, 1
          %s241 = smul.addr %s240, 4
          %s242 = scalar_lea.vmem [#allocation2], %s241
          %s244 = ssub.s32 64, 64
          %245 = vsyncadd %s239, %s244
          %s246 = smul.addr %s31, 64
          %s247 = scalar_lea.hbm %s0, %s246
          %s249 = sshll.u32 %s242, 4
          %s250 = int_to_ptr.vmem [resolvable:$true] %s249
          %252 = dma.hbm_to_vmem [thread:$0]  %s247, 64, %s250, %s239
        $region24: #{tpu_custom_call.1} parent=19 // pred_fallthru
          _
        // Predicated region
        $region25: #{tpu_custom_call.1} parent=19 // pred_check
          %p253 = pneg %p82
        $region26: #{tpu_custom_call.1} parent=19 // pred_check_branch
          %255 = sbr.rel (%p253) target = $region28
        $region27: #{tpu_custom_call.1} parent=19 // pred_region
          %s256 = sand.u32 %s24, 1
          %s257 = scalar_lea.sflag [#allocation6], %s256
          %s258 = sand.u32 %s72, 1
          %s259 = smul.addr %s258, 2
          %s260 = scalar_lea.vmem [#allocation5], %s259
          %s262 = ssub.s32 32, 32
          %263 = vsyncadd %s257, %s262
          %s264 = smul.addr %s32, 32
          %s265 = scalar_lea.hbm %s1, %s264
          %s267 = sshll.u32 %s260, 4
          %s268 = int_to_ptr.vmem [resolvable:$true] %s267
          %270 = dma.hbm_to_vmem [thread:$0]  %s265, 32, %s268, %s257
        $region28: #{tpu_custom_call.1} parent=19 // pred_fallthru
          _
        // Predicated region
        $region29: #{tpu_custom_call.1} parent=19 // pred_check
          %p271 = pneg %p108
        $region30: #{tpu_custom_call.1} parent=19 // pred_check_branch
          %273 = sbr.rel (%p271) target = $region32
        $region31: #{tpu_custom_call.1} parent=19 // pred_region
          %s274 = sand.u32 %s24, 1
          %s275 = scalar_lea.sflag [#allocation6], %s274
          %s276 = sand.u32 %s98, 1
          %s277 = smul.addr %s276, 2
          %s278 = scalar_lea.vmem [#allocation7], %s277
          %s280 = ssub.s32 32, 32
          %281 = vsyncadd %s275, %s280
          %s282 = smul.addr %s32, 32
          %s283 = scalar_lea.hbm %s2, %s282
          %s285 = sshll.u32 %s278, 4
          %s286 = int_to_ptr.vmem [resolvable:$true] %s285
          %288 = dma.hbm_to_vmem [thread:$0]  %s283, 32, %s286, %s275
        $region32: #{tpu_custom_call.1} parent=19 // pred_fallthru
          _
        // Predicated region
        $region33: #{tpu_custom_call.1} parent=19 // pred_check
          %p289 = pneg %p134
        $region34: #{tpu_custom_call.1} parent=19 // pred_check_branch
          %291 = sbr.rel (%p289) target = $region36
        $region35: #{tpu_custom_call.1} parent=19 // pred_region
          %s292 = sand.u32 %s24, 1
          %s293 = scalar_lea.sflag [#allocation9], %s292
          %s294 = sand.u32 %s124, 1
          %s295 = smul.addr %s294, 2
          %s296 = scalar_lea.vmem [#allocation8], %s295
          %s298 = ssub.s32 32, 32
          %299 = vsyncadd %s293, %s298
          %s300 = smul.addr %s32, 32
          %s301 = scalar_lea.hbm %s3, %s300
          %s303 = sshll.u32 %s296, 4
          %s304 = int_to_ptr.vmem [resolvable:$true] %s303
          %306 = dma.hbm_to_vmem [thread:$0]  %s301, 32, %s304, %s293
        $region36: #{tpu_custom_call.1} parent=19 // pred_fallthru
          _
        // Predicated region
        $region37: #{tpu_custom_call.1} parent=19 // pred_check
          %p307 = pneg %p160
        $region38: #{tpu_custom_call.1} parent=19 // pred_check_branch
          %309 = sbr.rel (%p307) target = $region40
        $region39: #{tpu_custom_call.1} parent=19 // pred_region
          %s310 = sand.u32 %s24, 1
          %s311 = scalar_lea.sflag [#allocation9], %s310
          %s312 = sand.u32 %s150, 1
          %s313 = smul.addr %s312, 2
          %s314 = scalar_lea.vmem [#allocation10], %s313
          %s316 = ssub.s32 32, 32
          %317 = vsyncadd %s311, %s316
          %s318 = smul.addr %s32, 32
          %s319 = scalar_lea.hbm %s4, %s318
          %s321 = sshll.u32 %s314, 4
          %s322 = int_to_ptr.vmem [resolvable:$true] %s321
          %324 = dma.hbm_to_vmem [thread:$0]  %s319, 32, %s322, %s311
        $region40: #{tpu_custom_call.1} parent=19 // pred_fallthru
          _
      $region20: #{tpu_custom_call.1} parent=5 // pred_fallthru
        _
      %p325 = scmp.le.s32.totalorder 1, %s24
      %p326 = scmp.lt.s32.totalorder %s24, 17
      %p327 = pnand %p325, %p326
      %p328 = pneg %p327
      // Predicated region
      $region41: #{tpu_custom_call.1} parent=5 // pred_check
        _
      $region42: #{tpu_custom_call.1} parent=5 // pred_check_branch
        %330 = sbr.rel (%p327) target = $region44
      $region43: #{tpu_custom_call.1} parent=5 // pred_region
        %s331 = ssub.s32 %s24, 1
        %s332 = sand.u32 %s49, 1
        %s333 = scalar_lea.sflag [#allocation3], %s332
        %s334 = sand.u32 %s49, 1
        %s335 = smul.addr %s334, 4
        %s336 = scalar_lea.vmem [#allocation2], %s335
        // Predicated region
        $region45: #{tpu_custom_call.1} parent=43 // pred_check
          %p337 = pneg %p62
        $region46: #{tpu_custom_call.1} parent=43 // pred_check_branch
          %339 = sbr.rel (%p337) target = $region48
        $region47: #{tpu_custom_call.1} parent=43 // pred_region
          %340 = dma.done %s333, 64
        $region48: #{tpu_custom_call.1} parent=43 // pred_fallthru
          _
        %s341 = sand.u32 %s29, 1
        %s342 = scalar_lea.sflag [#allocation6], %s341
        %s343 = sand.u32 %s75, 1
        %s344 = smul.addr %s343, 2
        %s345 = scalar_lea.vmem [#allocation5], %s344
        // Predicated region
        $region49: #{tpu_custom_call.1} parent=43 // pred_check
          %p346 = pneg %p88
        $region50: #{tpu_custom_call.1} parent=43 // pred_check_branch
          %348 = sbr.rel (%p346) target = $region52
        $region51: #{tpu_custom_call.1} parent=43 // pred_region
          %349 = dma.done %s342, 32
        $region52: #{tpu_custom_call.1} parent=43 // pred_fallthru
          _
        %s350 = sand.u32 %s29, 1
        %s351 = scalar_lea.sflag [#allocation6], %s350
        %s352 = sand.u32 %s101, 1
        %s353 = smul.addr %s352, 2
        %s354 = scalar_lea.vmem [#allocation7], %s353
        // Predicated region
        $region53: #{tpu_custom_call.1} parent=43 // pred_check
          %p355 = pneg %p114
        $region54: #{tpu_custom_call.1} parent=43 // pred_check_branch
          %357 = sbr.rel (%p355) target = $region56
        $region55: #{tpu_custom_call.1} parent=43 // pred_region
          %358 = dma.done %s351, 32
        $region56: #{tpu_custom_call.1} parent=43 // pred_fallthru
          _
        %s359 = sand.u32 %s29, 1
        %s360 = scalar_lea.sflag [#allocation9], %s359
        %s361 = sand.u32 %s127, 1
        %s362 = smul.addr %s361, 2
        %s363 = scalar_lea.vmem [#allocation8], %s362
        // Predicated region
        $region57: #{tpu_custom_call.1} parent=43 // pred_check
          %p364 = pneg %p140
        $region58: #{tpu_custom_call.1} parent=43 // pred_check_branch
          %366 = sbr.rel (%p364) target = $region60
        $region59: #{tpu_custom_call.1} parent=43 // pred_region
          %367 = dma.done %s360, 32
        $region60: #{tpu_custom_call.1} parent=43 // pred_fallthru
          _
        %s368 = sand.u32 %s29, 1
        %s369 = scalar_lea.sflag [#allocation9], %s368
        %s370 = sand.u32 %s153, 1
        %s371 = smul.addr %s370, 2
        %s372 = scalar_lea.vmem [#allocation10], %s371
        // Predicated region
        $region61: #{tpu_custom_call.1} parent=43 // pred_check
          %p373 = pneg %p166
        $region62: #{tpu_custom_call.1} parent=43 // pred_check_branch
          %375 = sbr.rel (%p373) target = $region64
        $region63: #{tpu_custom_call.1} parent=43 // pred_region
          %376 = dma.done %s369, 32
        $region64: #{tpu_custom_call.1} parent=43 // pred_fallthru
          _
        %s377 = sand.u32 %s49, 1
        %s378 = scalar_lea.sflag [#allocation3], %s377
        %s379 = sand.u32 %s49, 1
        %s380 = smul.addr %s379, 4
        %s381 = scalar_lea.vmem [#allocation2], %s380
        %p382 = pneg %p62
        %p383 = pneg %p59
        %s384 = sand.u32 %s29, 1
        %s385 = scalar_lea.sflag [#allocation6], %s384
        %s386 = sand.u32 %s75, 1
        %s387 = smul.addr %s386, 2
        %s388 = scalar_lea.vmem [#allocation5], %s387
        %p389 = pneg %p88
        %p390 = pneg %p85
        %s391 = sand.u32 %s29, 1
        %s392 = scalar_lea.sflag [#allocation6], %s391
        %s393 = sand.u32 %s101, 1
        %s394 = smul.addr %s393, 2
        %s395 = scalar_lea.vmem [#allocation7], %s394
        %p396 = pneg %p114
        %p397 = pneg %p111
        %s398 = sand.u32 %s29, 1
        %s399 = scalar_lea.sflag [#allocation9], %s398
        %s400 = sand.u32 %s127, 1
        %s401 = smul.addr %s400, 2
        %s402 = scalar_lea.vmem [#allocation8], %s401
        %p403 = pneg %p140
        %p404 = pneg %p137
        %s405 = sand.u32 %s29, 1
        %s406 = scalar_lea.sflag [#allocation9], %s405
        %s407 = sand.u32 %s153, 1
        %s408 = smul.addr %s407, 2
        %s409 = scalar_lea.vmem [#allocation10], %s408
        %p410 = pneg %p166
        %p411 = pneg %p163
        %p412 = pneg %p187
        %p413 = pneg %p184
        %p414 = pneg %p213
        %p415 = pneg %p210
        %s416 = sand.u32 %s200, 1
        %s417 = scalar_lea.sflag [#allocation4], %s416
        %s418 = sand.u32 %s200, 1
        %s419 = smul.addr %s418, 8
        %s420 = scalar_lea.vmem [#allocation11], %s419
        %p422 = scmp.eq.s32.totalorder %s34, 0
        // Predicated region
        $region65: #{tpu_custom_call.1} parent=43 // pred_check
          %p423 = pneg %p422
        $region66: #{tpu_custom_call.1} parent=43 // pred_check_branch
          %425 = sbr.rel (%p423) target = $region68
        $region67: #{tpu_custom_call.1} parent=43 // pred_region
          %v426 = vld [vmem:[%s5] sm:$0x1]
          %v428 = vlaneseq
          %v429 = vshrl.u32 %v428, 7
          %v430 = vsub.s32 0, %v429
          %v431 = vrot.slane %v426, %v430
          %vm433 = vcmask 261120
          %434 = vst.msk [vmem:[%s420] sm:$0xff] %vm433, %v431
        $region68: #{tpu_custom_call.1} parent=43 // pred_fallthru
          _
        %v435 = vld [vmem:[%s336] sm:$0xf]
        %v436 = vld [vmem:[%s345] sm:$0x3]
        %vm437 = vcmask 261120
        %v439 = vsel %vm437, %v435, 0
        %v442 = vsel %vm437, %v436, 0
        %444 = vmatprep.subr.bf16.mxu0 0
        %445 = vmatpush1.bf16.xpose.msra.mxu0 %v442
        %446 = vmatprep.subr.bf16.mxu0 0
        %447 = vmatpush1.bf16.xpose.msra.mxu0 0
        %448 = vmatprep.subr.bf16.mxu0 0
        %449 = vmatpush1.bf16.xpose.msra.mxu0 0
        %450 = vmatprep.subr.bf16.mxu0 0
        %451 = vmatpush1.bf16.xpose.msra.mxu0 0
        %452 = vmatprep.subr.bf16.mxu0 0
        %453 = vmatpush1.bf16.xpose.msra.mxu0 0
        %454 = vmatprep.subr.bf16.mxu0 0
        %455 = vmatpush1.bf16.xpose.msra.mxu0 0
        %456 = vmatprep.subr.bf16.mxu0 0
        %457 = vmatpush1.bf16.xpose.msra.mxu0 0
        %458 = vmatprep.subr.bf16.mxu0 0
        %459 = vmatpush1.bf16.xpose.msra.mxu0 0
        %460 = vmatprep.subr.bf16.mxu0 0
        %461 = vmatpush1.bf16.xpose.msra.mxu0 0
        %462 = vmatprep.subr.bf16.mxu0 0
        %463 = vmatpush1.bf16.xpose.msra.mxu0 0
        %464 = vmatprep.subr.bf16.mxu0 0
        %465 = vmatpush1.bf16.xpose.msra.mxu0 0
        %466 = vmatprep.subr.bf16.mxu0 0
        %467 = vmatpush1.bf16.xpose.msra.mxu0 0
        %468 = vmatprep.subr.bf16.mxu0 0
        %469 = vmatpush1.bf16.xpose.msra.mxu0 0
        %470 = vmatprep.subr.bf16.mxu0 0
        %471 = vmatpush1.bf16.xpose.msra.mxu0 0
        %472 = vmatprep.subr.bf16.mxu0 0
        %473 = vmatpush1.bf16.xpose.msra.mxu0 0
        %474 = vmatprep.subr.bf16.mxu0 0
        %475 = vmatpush1.bf16.xpose.msra.mxu0 0
        %476 = vmatprep.mubr.bf16.mxu0 0
        %477 = vmatmul.mubr.bf16.gmra.mrb[0].mxu0 %v439
        %v478 = vpop.f32.mrb[0].mxu0
        %v479 = vadd.f32 0.0, %v478
        %v480 = vpop.f32.mrb[0].mxu0
        %v481 = vpop.f32.mrb[0].mxu0
        %v482 = vpop.f32.mrb[0].mxu0
        %483 = vdwg.mxu0
        %v484 = vld [vmem:[%s354] sm:$0x3]
        %v486 = vsel %vm437, %v484, 0
        %488 = vmatprep.subr.bf16.mxu0 0
        %489 = vmatpush1.bf16.xpose.msra.mxu0 %v486
        %490 = vmatprep.subr.bf16.mxu0 0
        %491 = vmatpush1.bf16.xpose.msra.mxu0 0
        %492 = vmatprep.subr.bf16.mxu0 0
        %493 = vmatpush1.bf16.xpose.msra.mxu0 0
        %494 = vmatprep.subr.bf16.mxu0 0
        %495 = vmatpush1.bf16.xpose.msra.mxu0 0
        %496 = vmatprep.subr.bf16.mxu0 0
        %497 = vmatpush1.bf16.xpose.msra.mxu0 0
        %498 = vmatprep.subr.bf16.mxu0 0
        %499 = vmatpush1.bf16.xpose.msra.mxu0 0
        %500 = vmatprep.subr.bf16.mxu0 0
        %501 = vmatpush1.bf16.xpose.msra.mxu0 0
        %502 = vmatprep.subr.bf16.mxu0 0
        %503 = vmatpush1.bf16.xpose.msra.mxu0 0
        %504 = vmatprep.subr.bf16.mxu0 0
        %505 = vmatpush1.bf16.xpose.msra.mxu0 0
        %506 = vmatprep.subr.bf16.mxu0 0
        %507 = vmatpush1.bf16.xpose.msra.mxu0 0
        %508 = vmatprep.subr.bf16.mxu0 0
        %509 = vmatpush1.bf16.xpose.msra.mxu0 0
        %510 = vmatprep.subr.bf16.mxu0 0
        %511 = vmatpush1.bf16.xpose.msra.mxu0 0
        %512 = vmatprep.subr.bf16.mxu0 0
        %513 = vmatpush1.bf16.xpose.msra.mxu0 0
        %514 = vmatprep.subr.bf16.mxu0 0
        %515 = vmatpush1.bf16.xpose.msra.mxu0 0
        %516 = vmatprep.subr.bf16.mxu0 0
        %517 = vmatpush1.bf16.xpose.msra.mxu0 0
        %518 = vmatprep.subr.bf16.mxu0 0
        %519 = vmatpush1.bf16.xpose.msra.mxu0 0
        %520 = vmatprep.mubr.bf16.mxu0 0
        %521 = vmatmul.mubr.bf16.gmra.mrb[0].mxu0 %v439
        %v522 = vpop.f32.mrb[0].mxu0
        %v523 = vadd.f32 0.0, %v522
        %v524 = vpop.f32.mrb[0].mxu0
        %v525 = vpop.f32.mrb[0].mxu0
        %v526 = vpop.f32.mrb[0].mxu0
        %527 = vdwg.mxu0
        %v528 = vld [vmem:[%s363] sm:$0x3]
        %v530 = vsel %vm437, %v528, 0
        %532 = vmatprep.subr.bf16.mxu0 0
        %533 = vmatpush1.bf16.xpose.msra.mxu0 %v530
        %534 = vmatprep.subr.bf16.mxu0 0
        %535 = vmatpush1.bf16.xpose.msra.mxu0 0
        %536 = vmatprep.subr.bf16.mxu0 0
        %537 = vmatpush1.bf16.xpose.msra.mxu0 0
        %538 = vmatprep.subr.bf16.mxu0 0
        %539 = vmatpush1.bf16.xpose.msra.mxu0 0
        %540 = vmatprep.subr.bf16.mxu0 0
        %541 = vmatpush1.bf16.xpose.msra.mxu0 0
        %542 = vmatprep.subr.bf16.mxu0 0
        %543 = vmatpush1.bf16.xpose.msra.mxu0 0
        %544 = vmatprep.subr.bf16.mxu0 0
        %545 = vmatpush1.bf16.xpose.msra.mxu0 0
        %546 = vmatprep.subr.bf16.mxu0 0
        %547 = vmatpush1.bf16.xpose.msra.mxu0 0
        %548 = vmatprep.subr.bf16.mxu0 0
        %549 = vmatpush1.bf16.xpose.msra.mxu0 0
        %550 = vmatprep.subr.bf16.mxu0 0
        %551 = vmatpush1.bf16.xpose.msra.mxu0 0
        %552 = vmatprep.subr.bf16.mxu0 0
        %553 = vmatpush1.bf16.xpose.msra.mxu0 0
        %554 = vmatprep.subr.bf16.mxu0 0
        %555 = vmatpush1.bf16.xpose.msra.mxu0 0
        %556 = vmatprep.subr.bf16.mxu0 0
        %557 = vmatpush1.bf16.xpose.msra.mxu0 0
        %558 = vmatprep.subr.bf16.mxu0 0
        %559 = vmatpush1.bf16.xpose.msra.mxu0 0
        %560 = vmatprep.subr.bf16.mxu0 0
        %561 = vmatpush1.bf16.xpose.msra.mxu0 0
        %562 = vmatprep.subr.bf16.mxu0 0
        %563 = vmatpush1.bf16.xpose.msra.mxu0 0
        %564 = vmatprep.mubr.bf16.mxu0 0
        %565 = vmatmul.mubr.bf16.gmra.mrb[0].mxu0 %v439
        %v566 = vpop.f32.mrb[0].mxu0
        %v567 = vadd.f32 0.0, %v566
        %v568 = vpop.f32.mrb[0].mxu0
        %v569 = vpop.f32.mrb[0].mxu0
        %v570 = vpop.f32.mrb[0].mxu0
        %571 = vdwg.mxu0
        %v572 = vmul.f32 %v479, 0.5
        %v573 = vpack.c.bf16 %v572, %v572
        %v574 = vpack.c.bf16 %v523, %v523
        %vm575 = vcmask 31744
        %v577 = vsel %vm575, %v573, 0
        %v580 = vsel %vm575, %v574, 0
        %582 = vmatprep.subr.bf16.mxu0 0
        %583 = vmatpush1.bf16.xpose.msra.mxu0 %v580
        %584 = vmatprep.subr.bf16.mxu0 0
        %585 = vmatpush1.bf16.xpose.msra.mxu0 0
        %586 = vmatprep.subr.bf16.mxu0 0
        %587 = vmatpush1.bf16.xpose.msra.mxu0 0
        %588 = vmatprep.subr.bf16.mxu0 0
        %589 = vmatpush1.bf16.xpose.msra.mxu0 0
        %590 = vmatprep.subr.bf16.mxu0 0
        %591 = vmatpush1.bf16.xpose.msra.mxu0 0
        %592 = vmatprep.subr.bf16.mxu0 0
        %593 = vmatpush1.bf16.xpose.msra.mxu0 0
        %594 = vmatprep.subr.bf16.mxu0 0
        %595 = vmatpush1.bf16.xpose.msra.mxu0 0
        %596 = vmatprep.subr.bf16.mxu0 0
        %597 = vmatpush1.bf16.xpose.msra.mxu0 0
        %598 = vmatprep.subr.bf16.mxu0 0
        %599 = vmatpush1.bf16.xpose.msra.mxu0 0
        %600 = vmatprep.subr.bf16.mxu0 0
        %601 = vmatpush1.bf16.xpose.msra.mxu0 0
        %602 = vmatprep.subr.bf16.mxu0 0
        %603 = vmatpush1.bf16.xpose.msra.mxu0 0
        %604 = vmatprep.subr.bf16.mxu0 0
        %605 = vmatpush1.bf16.xpose.msra.mxu0 0
        %606 = vmatprep.subr.bf16.mxu0 0
        %607 = vmatpush1.bf16.xpose.msra.mxu0 0
        %608 = vmatprep.subr.bf16.mxu0 0
        %609 = vmatpush1.bf16.xpose.msra.mxu0 0
        %610 = vmatprep.subr.bf16.mxu0 0
        %611 = vmatpush1.bf16.xpose.msra.mxu0 0
        %612 = vmatprep.subr.bf16.mxu0 0
        %613 = vmatpush1.bf16.xpose.msra.mxu0 0
        %614 = vmatprep.mubr.bf16.mxu0 0
        %615 = vmatmul.mubr.bf16.gmra.mrb[0].mxu0 %v577
        %v616 = vpop.f32.mrb[0].mxu0
        %v617 = vadd.f32 0.0, %v616
        %v618 = vpop.f32.mrb[0].mxu0
        %v619 = vpop.f32.mrb[0].mxu0
        %v620 = vpop.f32.mrb[0].mxu0
        %621 = vdwg.mxu0
        %vm622 = vcmask 64512
        %v623 = vsel %vm622, %v617, -inf
        %624 = vmax.xlane.f32.xlu0 %v623
        %v625 = vpop.xlane.xlu0 %624
        %v626 = vsub.f32 %v617, %v625
        %v627 = vmul.f32 %v626, 1.442695
        %v628 = vpow.pop %v627
        %v629 = vsel %vm622, %v628, 0.0
        %630 = vadd.xlane.f32.xlu0 %v629
        %v631 = vpop.xlane.xlu0 %630
        %v632 = vrcp.pop %v631
        %v633 = vmul.f32 %v628, %v632
        %v634 = vpack.c.bf16 %v633, %v633
        %v635 = vpack.c.bf16 %v567, %v567
        %v637 = vsel %vm622, %v634, 0
        %vm639 = vcmask 1043456
        %v641 = vsel %vm639, %v635, 0
        %643 = vmatprep.subr.bf16.mxu0 0
        %644 = vmatpush1.bf16.msra.mxu0 %v641
        %645 = vmatprep.subr.bf16.mxu0 0
        %646 = vmatpush1.bf16.msra.mxu0 0
        %647 = vmatprep.subr.bf16.mxu0 0
        %648 = vmatpush1.bf16.msra.mxu0 0
        %649 = vmatprep.subr.bf16.mxu0 0
        %650 = vmatpush1.bf16.msra.mxu0 0
        %651 = vmatprep.subr.bf16.mxu0 0
        %652 = vmatpush1.bf16.msra.mxu0 0
        %653 = vmatprep.subr.bf16.mxu0 0
        %654 = vmatpush1.bf16.msra.mxu0 0
        %655 = vmatprep.subr.bf16.mxu0 0
        %656 = vmatpush1.bf16.msra.mxu0 0
        %657 = vmatprep.subr.bf16.mxu0 0
        %658 = vmatpush1.bf16.msra.mxu0 0
        %659 = vmatprep.subr.bf16.mxu0 0
        %660 = vmatpush1.bf16.msra.mxu0 0
        %661 = vmatprep.subr.bf16.mxu0 0
        %662 = vmatpush1.bf16.msra.mxu0 0
        %663 = vmatprep.subr.bf16.mxu0 0
        %664 = vmatpush1.bf16.msra.mxu0 0
        %665 = vmatprep.subr.bf16.mxu0 0
        %666 = vmatpush1.bf16.msra.mxu0 0
        %667 = vmatprep.subr.bf16.mxu0 0
        %668 = vmatpush1.bf16.msra.mxu0 0
        %669 = vmatprep.subr.bf16.mxu0 0
        %670 = vmatpush1.bf16.msra.mxu0 0
        %671 = vmatprep.subr.bf16.mxu0 0
        %672 = vmatpush1.bf16.msra.mxu0 0
        %673 = vmatprep.subr.bf16.mxu0 0
        %674 = vmatpush1.bf16.msra.mxu0 0
        %675 = vmatprep.mubr.bf16.mxu0 0
        %676 = vmatmul.mubr.bf16.gmra.mrb[0].mxu0 %v637
        %v677 = vpop.f32.mrb[0].mxu0
        %v678 = vadd.f32 0.0, %v677
        %v679 = vpop.f32.mrb[0].mxu0
        %v680 = vpop.f32.mrb[0].mxu0
        %v681 = vpop.f32.mrb[0].mxu0
        %682 = vdwg.mxu0
        %v683 = vld [vmem:[%s420] sm:$0xff]
        %v684 = vpack.c.bf16 %v678, %v678
        %v685 = vld [vmem:[%s372] sm:$0x3]
        %v687 = vsel %vm575, %v684, 0
        %vm689 = vcmask 1041408
        %v691 = vsel %vm689, %v685, 0
        %693 = vmatprep.subr.bf16.mxu0 0
        %694 = vmatpush1.bf16.msra.mxu0 %v691
        %695 = vmatprep.subr.bf16.mxu0 0
        %696 = vmatpush1.bf16.msra.mxu0 0
        %697 = vmatprep.subr.bf16.mxu0 0
        %698 = vmatpush1.bf16.msra.mxu0 0
        %699 = vmatprep.subr.bf16.mxu0 0
        %700 = vmatpush1.bf16.msra.mxu0 0
        %701 = vmatprep.subr.bf16.mxu0 0
        %702 = vmatpush1.bf16.msra.mxu0 0
        %703 = vmatprep.subr.bf16.mxu0 0
        %704 = vmatpush1.bf16.msra.mxu0 0
        %705 = vmatprep.subr.bf16.mxu0 0
        %706 = vmatpush1.bf16.msra.mxu0 0
        %707 = vmatprep.subr.bf16.mxu0 0
        %708 = vmatpush1.bf16.msra.mxu0 0
        %709 = vmatprep.subr.bf16.mxu0 0
        %710 = vmatpush1.bf16.msra.mxu0 0
        %711 = vmatprep.subr.bf16.mxu0 0
        %712 = vmatpush1.bf16.msra.mxu0 0
        %713 = vmatprep.subr.bf16.mxu0 0
        %714 = vmatpush1.bf16.msra.mxu0 0
        %715 = vmatprep.subr.bf16.mxu0 0
        %716 = vmatpush1.bf16.msra.mxu0 0
        %717 = vmatprep.subr.bf16.mxu0 0
        %718 = vmatpush1.bf16.msra.mxu0 0
        %719 = vmatprep.subr.bf16.mxu0 0
        %720 = vmatpush1.bf16.msra.mxu0 0
        %721 = vmatprep.subr.bf16.mxu0 0
        %722 = vmatpush1.bf16.msra.mxu0 0
        %723 = vmatprep.subr.bf16.mxu0 0
        %724 = vmatpush1.bf16.msra.mxu0 0
        %725 = vmatprep.mubr.bf16.mxu0 0
        %726 = vmatmul.mubr.bf16.gmra.mrb[0].mxu0 %v687
        %v727 = vpop.f32.mrb[0].mxu0
        %v728 = vadd.f32 0.0, %v727
        %v729 = vpop.f32.mrb[0].mxu0
        %v730 = vpop.f32.mrb[0].mxu0
        %v731 = vpop.f32.mrb[0].mxu0
        %732 = vdwg.mxu0
        %v733 = vadd.f32 %v683, %v728
        %734 = vst.msk [vmem:[%s420] sm:$0xff] %vm437, %v733
        %s735 = sand.u32 %s200, 1
        %s736 = scalar_lea.sflag [#allocation4], %s735
        %s737 = sand.u32 %s200, 1
        %s738 = smul.addr %s737, 8
        %s739 = scalar_lea.vmem [#allocation11], %s738
        // Predicated region
        $region69: #{tpu_custom_call.1} parent=43 // pred_check
          %p740 = pneg %p210
        $region70: #{tpu_custom_call.1} parent=43 // pred_check_branch
          %742 = sbr.rel (%p740) target = $region72
        $region71: #{tpu_custom_call.1} parent=43 // pred_region
          %s744 = ssub.s32 128, 128
          %745 = vsyncadd %s736, %s744
          %s746 = smul.addr %s33, 128
          %s747 = scalar_lea.hbm %s6, %s746
          %s749 = sshll.u32 %s739, 4
          %s750 = int_to_ptr.vmem [resolvable:$true] %s749
          %752 = dma.vmem_to_hbm [thread:$0]  %s750, 128, %s747, %s736
        $region72: #{tpu_custom_call.1} parent=43 // pred_fallthru
          _
      $region44: #{tpu_custom_call.1} parent=5 // pred_fallthru
        _
      %p753 = scmp.le.s32.totalorder 2, %s24
      // Predicated region
      $region73: #{tpu_custom_call.1} parent=5 // pred_check
        %p754 = pneg %p753
      $region74: #{tpu_custom_call.1} parent=5 // pred_check_branch
        %756 = sbr.rel (%p754) target = $region76
      $region75: #{tpu_custom_call.1} parent=5 // pred_region
        %s757 = ssub.s32 %s24, 2
        // Predicated region
        $region77: #{tpu_custom_call.1} parent=75 // pred_check
          %p758 = pneg %p216
        $region78: #{tpu_custom_call.1} parent=75 // pred_check_branch
          %760 = sbr.rel (%p758) target = $region80
        $region79: #{tpu_custom_call.1} parent=75 // pred_region
          %s761 = sand.u32 %s201, 1
          %s762 = scalar_lea.sflag [#allocation4], %s761
          %s763 = sand.u32 %s201, 1
          %s764 = smul.addr %s763, 8
          %s765 = scalar_lea.vmem [#allocation11], %s764
          %766 = dma.done %s762, 128
        $region80: #{tpu_custom_call.1} parent=75 // pred_fallthru
          _
      $region76: #{tpu_custom_call.1} parent=5 // pred_fallthru
        _
    $region6: #{tpu_custom_call.1} parent=1 // loop_footer
      %s28 = sadd.s32 1, %s24
    $region7: #{tpu_custom_call.1} parent=1 // loop_footer_branch
      %23 = sbr.rel target = $region3
    $region8: #{tpu_custom_call.1} parent=1 // loop_exit
      _
    %767 = vsyncpa [#allocation3], 1
    %s768 = scalar_lea.sflag [#allocation3], 1
    %769 = vsyncpa %s768, 1
    %770 = vsyncpa [#allocation6], 1
    %s771 = scalar_lea.sflag [#allocation6], 1
    %772 = vsyncpa %s771, 1
    %773 = vsyncpa [#allocation9], 1
    %s774 = scalar_lea.sflag [#allocation9], 1
    %775 = vsyncpa %s774, 1
    %776 = vsyncpa [#allocation4], 1
    %s777 = scalar_lea.sflag [#allocation4], 1
    %778 = vsyncpa %s777, 1

</llo_original>
